<compile_context>
chip_gen: v7x
topology: tpu7x:2x2x1
jax: 0.10.0
libtpu: 0.0.40
codegen_flags: <defaults>
</compile_context>

<pallas_src>
import jax
import jax.numpy as jnp
from jax import lax
from jax.experimental import pallas as pl
from jax.experimental.pallas import tpu as pltpu

# 3x3 mask-type-'B' taps that survive the mask:
#   row 0: cols 0,1,2; row 1: cols 0,1 (center included); row 2: none.
_MASK_B_POSITIONS = ((0, 0), (0, 1), (0, 2), (1, 0), (1, 1))


def _make_kernel(w_img, p1, p2):
    """Build the per-image kernel.

    w_img : image width W (flat-row stride)
    p1    : (H-2)*W  -- conv1 is evaluated over this many flat positions
    p2    : (H-4)*W  -- conv2 / residual / output flat positions
    """
    res_off = 2 * w_img + 2  # flat offset of x[:, 2, 2] == residual start

    def kernel(x_ref, w1t_ref, b1_ref, w2t_ref, b2_ref, o_ref, h1_ref):
        # x_ref:   (C, H*W)   flat image, C on sublanes, spatial on lanes
        # w*t_ref: (5, C, C)  per-tap transposed (Cout, Cin) masked weights
        # b*_ref:  (C, 1)
        # o_ref:   (C, P2)
        # h1_ref:  (C, P1)    VMEM scratch for the conv1+ReLU activation

        # ---- conv1 over the full-W row grid: 5 accumulated (C,C)@(C,P1)
        #      matmuls on constant-offset views of the input tile ----
        acc1 = None
        for t, (di, dj) in enumerate(_MASK_B_POSITIONS):
            off = di * w_img + dj
            xt = x_ref[:, pl.ds(off, p1)]                      # (C, P1)
            ct = jnp.dot(w1t_ref[t], xt,
                         preferred_element_type=jnp.float32)   # (C, P1)
            acc1 = ct if acc1 is None else acc1 + ct
        h1_ref[...] = jnp.maximum(acc1 + b1_ref[...], 0.0)      # bias + ReLU

        # ---- conv2: same pattern on the resident activation tile ----
        acc2 = None
        for t, (di, dj) in enumerate(_MASK_B_POSITIONS):
            off = di * w_img + dj
            ht = h1_ref[:, pl.ds(off, p2)]                     # (C, P2)
            ct = jnp.dot(w2t_ref[t], ht,
                         preferred_element_type=jnp.float32)   # (C, P2)
            acc2 = ct if acc2 is None else acc2 + ct

        # ---- bias + residual (contiguous flat slice of x), lane-dense store
        res = x_ref[:, pl.ds(res_off, p2)]                     # (C, P2)
        o_ref[...] = (acc2 + b2_ref[...] + res).astype(o_ref.dtype)

    return kernel


def mask_res_block(x_nchw, w1, b1, w2, b2):
    """x_nchw: (N, C, H, W) f32.  w*: (3, 3, Cin, Cout) already masked ('B').
    b*: (C,).  Returns (N, C, H-4, W-4)."""
    n, c, h, w = x_nchw.shape
    hw = h * w
    p1 = (h - 2) * w
    p2 = (h - 4) * w

    # Wrapper-side layout plumbing (cheap, no byte amplification):
    x_flat = x_nchw.reshape(n, c, hw)                            # (N, C, H*W)
    w1t = jnp.stack([w1[di, dj].T for (di, dj) in _MASK_B_POSITIONS], axis=0)
    w2t = jnp.stack([w2[di, dj].T for (di, dj) in _MASK_B_POSITIONS], axis=0)
    b1c = b1.reshape(c, 1)
    b2c = b2.reshape(c, 1)

    out_flat = pl.pallas_call(
        _make_kernel(w, p1, p2),
        out_shape=jax.ShapeDtypeStruct((n, c, p2), x_nchw.dtype),
        grid=(n,),
        in_specs=[
            # One whole flat image per grid step (squeezed batch dim).
            pl.BlockSpec((None, c, hw), lambda i: (i, 0, 0)),
            # Constant index maps -> weights/biases stay VMEM-resident
            # across grid steps (no per-step re-DMA).
            pl.BlockSpec((5, c, c), lambda i: (0, 0, 0)),
            pl.BlockSpec((c, 1), lambda i: (0, 0)),
            pl.BlockSpec((5, c, c), lambda i: (0, 0, 0)),
            pl.BlockSpec((c, 1), lambda i: (0, 0)),
        ],
        out_specs=pl.BlockSpec((None, c, p2), lambda i: (i, 0, 0)),
        scratch_shapes=[pltpu.VMEM((c, p1), jnp.float32)],
        compiler_params=pltpu.CompilerParams(
            dimension_semantics=("parallel",)),
    )(x_flat, w1t, b1c, w2t, b2c)

    # Crop the garbage right-edge columns produced by the full-row-grid conv.
    out = out_flat.reshape(n, c, h - 4, w)[:, :, :, : w - 4]
    return out


def _reference_forward(x_nchw, w1, b1, w2, b2):
    """Pure-JAX reference (lax conv) for correctness checking."""
    dn = ('NCHW', 'HWIO', 'NCHW')
    out = lax.conv_general_dilated(x_nchw, w1, (1, 1), 'VALID',
                                   dimension_numbers=dn)
    out = out + b1.reshape(1, -1, 1, 1)
    out = jnp.maximum(out, 0.0)
    out = lax.conv_general_dilated(out, w2, (1, 1), 'VALID',
                                   dimension_numbers=dn)
    out = out + b2.reshape(1, -1, 1, 1)
    return out + x_nchw[:, :, 2:-2, 2:-2]


def _make_masked_weights(key, c):
    """Deterministic init; weight layout (kH, kW, Cin, Cout), mask type 'B'."""
    k1, k2, k3, k4 = jax.random.split(key, 4)
    fan_in = c * 3 * 3
    bound = 1.0 / jnp.sqrt(fan_in)
    w1 = jax.random.uniform(k1, (3, 3, c, c), jnp.float32, -bound, bound)
    w2 = jax.random.uniform(k2, (3, 3, c, c), jnp.float32, -bound, bound)
    b1 = jax.random.uniform(k3, (c,), jnp.float32, -bound, bound)
    b2 = jax.random.uniform(k4, (c,), jnp.float32, -bound, bound)
    mask = jnp.zeros((3, 3), jnp.float32)
    for (di, dj) in _MASK_B_POSITIONS:
        mask = mask.at[di, dj].set(1.0)
    mask = mask[:, :, None, None]
    return w1 * mask, b1, w2 * mask, b2


if __name__ == "__main__":
    key = jax.random.PRNGKey(0)
    kx, kw = jax.random.split(key)

    N, C, H, W = 2, 4, 16, 16
    x = jax.random.normal(kx, (N, C, H, W), jnp.float32)
    w1, b1, w2, b2 = _make_masked_weights(kw, C)

    out = jax.block_until_ready(mask_res_block(x, w1, b1, w2, b2))
    ref = jax.block_until_ready(_reference_forward(x, w1, b1, w2, b2))

    assert out.shape == (N, C, H - 4, W - 4), out.shape
    assert jnp.allclose(out, ref, atol=1e-4, rtol=1e-4), \
        float(jnp.max(jnp.abs(out - ref)))

    print("KERNEL_OK")
</pallas_src>

<mosaic_0001>
module attributes {stable_mosaic.version = 11 : i64} {
  func.func @kernel(%arg0: i32, %arg1: memref<1x4x256xf32, #tpu.memory_space<vmem>>, %arg2: memref<5x4x4xf32, #tpu.memory_space<vmem>>, %arg3: memref<4x1xf32, #tpu.memory_space<vmem>>, %arg4: memref<5x4x4xf32, #tpu.memory_space<vmem>>, %arg5: memref<4x1xf32, #tpu.memory_space<vmem>>, %arg6: memref<1x4x192xf32, #tpu.memory_space<vmem>>, %arg7: memref<4x224xf32, #tpu.memory_space<vmem>>) attributes {dimension_semantics = [#tpu.dimension_semantics<parallel>], iteration_bounds = array<i64: 2>, scalar_prefetch = 0 : i64, scratch_operands = 1 : i64, tpu.core_type = #tpu.core_type<tc>, window_params = [{transform_indices = @transform_0, window_bounds = array<i64: 1, 4, 256>}, {pipeline_mode = #tpu.pipeline_mode<synchronous>, transform_indices = @transform_1, window_bounds = array<i64: 5, 4, 4>}, {pipeline_mode = #tpu.pipeline_mode<synchronous>, transform_indices = @transform_2, window_bounds = array<i64: 4, 1>}, {pipeline_mode = #tpu.pipeline_mode<synchronous>, transform_indices = @transform_3, window_bounds = array<i64: 5, 4, 4>}, {pipeline_mode = #tpu.pipeline_mode<synchronous>, transform_indices = @transform_4, window_bounds = array<i64: 4, 1>}, {transform_indices = @transform_5, window_bounds = array<i64: 1, 4, 192>}]} {
    %c0 = arith.constant 0 : index
    %c0_0 = arith.constant 0 : index
    %c0_1 = arith.constant 0 : index
    %0 = vector.load %arg1[%c0, %c0_0, %c0_1] : memref<1x4x256xf32, #tpu.memory_space<vmem>>, vector<1x4x224xf32>
    %1 = vector.shape_cast %0 : vector<1x4x224xf32> to vector<4x224xf32>
    %c0_2 = arith.constant 0 : index
    %c0_3 = arith.constant 0 : index
    %c0_4 = arith.constant 0 : index
    %2 = vector.load %arg2[%c0_2, %c0_3, %c0_4] : memref<5x4x4xf32, #tpu.memory_space<vmem>>, vector<1x4x4xf32>
    %3 = vector.shape_cast %2 : vector<1x4x4xf32> to vector<4x4xf32>
    %cst = arith.constant dense<0.000000e+00> : vector<4x224xf32>
    %4 = tpu.matmul %3, %1, %cst {dimension_numbers = #tpu.dot_dimension_numbers<[1], [0], [0], [1], [0, 0, 1, 1], [], []>} : vector<4x4xf32>, vector<4x224xf32>, vector<4x224xf32> -> vector<4x224xf32>
    %c0_5 = arith.constant 0 : index
    %c0_6 = arith.constant 0 : index
    %c1 = arith.constant 1 : index
    %5 = vector.load %arg1[%c0_5, %c0_6, %c1] : memref<1x4x256xf32, #tpu.memory_space<vmem>>, vector<1x4x224xf32>
    %6 = vector.shape_cast %5 : vector<1x4x224xf32> to vector<4x224xf32>
    %c1_7 = arith.constant 1 : index
    %c0_8 = arith.constant 0 : index
    %c0_9 = arith.constant 0 : index
    %7 = vector.load %arg2[%c1_7, %c0_8, %c0_9] : memref<5x4x4xf32, #tpu.memory_space<vmem>>, vector<1x4x4xf32>
    %8 = vector.shape_cast %7 : vector<1x4x4xf32> to vector<4x4xf32>
    %cst_10 = arith.constant dense<0.000000e+00> : vector<4x224xf32>
    %9 = tpu.matmul %8, %6, %cst_10 {dimension_numbers = #tpu.dot_dimension_numbers<[1], [0], [0], [1], [0, 0, 1, 1], [], []>} : vector<4x4xf32>, vector<4x224xf32>, vector<4x224xf32> -> vector<4x224xf32>
    %10 = arith.addf %4, %9 : vector<4x224xf32>
    %c0_11 = arith.constant 0 : index
    %c0_12 = arith.constant 0 : index
    %c2 = arith.constant 2 : index
    %11 = vector.load %arg1[%c0_11, %c0_12, %c2] : memref<1x4x256xf32, #tpu.memory_space<vmem>>, vector<1x4x224xf32>
    %12 = vector.shape_cast %11 : vector<1x4x224xf32> to vector<4x224xf32>
    %c2_13 = arith.constant 2 : index
    %c0_14 = arith.constant 0 : index
    %c0_15 = arith.constant 0 : index
    %13 = vector.load %arg2[%c2_13, %c0_14, %c0_15] : memref<5x4x4xf32, #tpu.memory_space<vmem>>, vector<1x4x4xf32>
    %14 = vector.shape_cast %13 : vector<1x4x4xf32> to vector<4x4xf32>
    %cst_16 = arith.constant dense<0.000000e+00> : vector<4x224xf32>
    %15 = tpu.matmul %14, %12, %cst_16 {dimension_numbers = #tpu.dot_dimension_numbers<[1], [0], [0], [1], [0, 0, 1, 1], [], []>} : vector<4x4xf32>, vector<4x224xf32>, vector<4x224xf32> -> vector<4x224xf32>
    %16 = arith.addf %10, %15 : vector<4x224xf32>
    %c0_17 = arith.constant 0 : index
    %c0_18 = arith.constant 0 : index
    %c16 = arith.constant 16 : index
    %17 = vector.load %arg1[%c0_17, %c0_18, %c16] : memref<1x4x256xf32, #tpu.memory_space<vmem>>, vector<1x4x224xf32>
    %18 = vector.shape_cast %17 : vector<1x4x224xf32> to vector<4x224xf32>
    %c3 = arith.constant 3 : index
    %c0_19 = arith.constant 0 : index
    %c0_20 = arith.constant 0 : index
    %19 = vector.load %arg2[%c3, %c0_19, %c0_20] : memref<5x4x4xf32, #tpu.memory_space<vmem>>, vector<1x4x4xf32>
    %20 = vector.shape_cast %19 : vector<1x4x4xf32> to vector<4x4xf32>
    %cst_21 = arith.constant dense<0.000000e+00> : vector<4x224xf32>
    %21 = tpu.matmul %20, %18, %cst_21 {dimension_numbers = #tpu.dot_dimension_numbers<[1], [0], [0], [1], [0, 0, 1, 1], [], []>} : vector<4x4xf32>, vector<4x224xf32>, vector<4x224xf32> -> vector<4x224xf32>
    %22 = arith.addf %16, %21 : vector<4x224xf32>
    %c0_22 = arith.constant 0 : index
    %c0_23 = arith.constant 0 : index
    %c17 = arith.constant 17 : index
    %23 = vector.load %arg1[%c0_22, %c0_23, %c17] : memref<1x4x256xf32, #tpu.memory_space<vmem>>, vector<1x4x224xf32>
    %24 = vector.shape_cast %23 : vector<1x4x224xf32> to vector<4x224xf32>
    %c4 = arith.constant 4 : index
    %c0_24 = arith.constant 0 : index
    %c0_25 = arith.constant 0 : index
    %25 = vector.load %arg2[%c4, %c0_24, %c0_25] : memref<5x4x4xf32, #tpu.memory_space<vmem>>, vector<1x4x4xf32>
    %26 = vector.shape_cast %25 : vector<1x4x4xf32> to vector<4x4xf32>
    %cst_26 = arith.constant dense<0.000000e+00> : vector<4x224xf32>
    %27 = tpu.matmul %26, %24, %cst_26 {dimension_numbers = #tpu.dot_dimension_numbers<[1], [0], [0], [1], [0, 0, 1, 1], [], []>} : vector<4x4xf32>, vector<4x224xf32>, vector<4x224xf32> -> vector<4x224xf32>
    %28 = arith.addf %22, %27 : vector<4x224xf32>
    %c0_27 = arith.constant 0 : index
    %c0_28 = arith.constant 0 : index
    %29 = vector.load %arg3[%c0_27, %c0_28] : memref<4x1xf32, #tpu.memory_space<vmem>>, vector<4x1xf32>
    %30 = vector.broadcast %29 : vector<4x1xf32> to vector<4x224xf32>
    %31 = arith.addf %28, %30 : vector<4x224xf32>
    %cst_29 = arith.constant 0.000000e+00 : f32
    %32 = vector.broadcast %cst_29 : f32 to vector<4x224xf32>
    %33 = arith.maximumf %31, %32 : vector<4x224xf32>
    %c0_30 = arith.constant 0 : index
    %c0_31 = arith.constant 0 : index
    %34 = vector.load %arg7[%c0_30, %c0_31] : memref<4x224xf32, #tpu.memory_space<vmem>>, vector<4x224xf32>
    tpu.vector_store %arg7[%c0_30, %c0_31], %33 {strides = array<i32>} : memref<4x224xf32, #tpu.memory_space<vmem>>, vector<4x224xf32>,
    %c0_32 = arith.constant 0 : index
    %c0_33 = arith.constant 0 : index
    %35 = vector.load %arg7[%c0_32, %c0_33] : memref<4x224xf32, #tpu.memory_space<vmem>>, vector<4x192xf32>
    %c0_34 = arith.constant 0 : index
    %c0_35 = arith.constant 0 : index
    %c0_36 = arith.constant 0 : index
    %36 = vector.load %arg4[%c0_34, %c0_35, %c0_36] : memref<5x4x4xf32, #tpu.memory_space<vmem>>, vector<1x4x4xf32>
    %37 = vector.shape_cast %36 : vector<1x4x4xf32> to vector<4x4xf32>
    %cst_37 = arith.constant dense<0.000000e+00> : vector<4x192xf32>
    %38 = tpu.matmul %37, %35, %cst_37 {dimension_numbers = #tpu.dot_dimension_numbers<[1], [0], [0], [1], [0, 0, 1, 1], [], []>} : vector<4x4xf32>, vector<4x192xf32>, vector<4x192xf32> -> vector<4x192xf32>
    %c0_38 = arith.constant 0 : index
    %c1_39 = arith.constant 1 : index
    %39 = vector.load %arg7[%c0_38, %c1_39] : memref<4x224xf32, #tpu.memory_space<vmem>>, vector<4x192xf32>
    %c1_40 = arith.constant 1 : index
    %c0_41 = arith.constant 0 : index
    %c0_42 = arith.constant 0 : index
    %40 = vector.load %arg4[%c1_40, %c0_41, %c0_42] : memref<5x4x4xf32, #tpu.memory_space<vmem>>, vector<1x4x4xf32>
    %41 = vector.shape_cast %40 : vector<1x4x4xf32> to vector<4x4xf32>
    %cst_43 = arith.constant dense<0.000000e+00> : vector<4x192xf32>
    %42 = tpu.matmul %41, %39, %cst_43 {dimension_numbers = #tpu.dot_dimension_numbers<[1], [0], [0], [1], [0, 0, 1, 1], [], []>} : vector<4x4xf32>, vector<4x192xf32>, vector<4x192xf32> -> vector<4x192xf32>
    %43 = arith.addf %38, %42 : vector<4x192xf32>
    %c0_44 = arith.constant 0 : index
    %c2_45 = arith.constant 2 : index
    %44 = vector.load %arg7[%c0_44, %c2_45] : memref<4x224xf32, #tpu.memory_space<vmem>>, vector<4x192xf32>
    %c2_46 = arith.constant 2 : index
    %c0_47 = arith.constant 0 : index
    %c0_48 = arith.constant 0 : index
    %45 = vector.load %arg4[%c2_46, %c0_47, %c0_48] : memref<5x4x4xf32, #tpu.memory_space<vmem>>, vector<1x4x4xf32>
    %46 = vector.shape_cast %45 : vector<1x4x4xf32> to vector<4x4xf32>
    %cst_49 = arith.constant dense<0.000000e+00> : vector<4x192xf32>
    %47 = tpu.matmul %46, %44, %cst_49 {dimension_numbers = #tpu.dot_dimension_numbers<[1], [0], [0], [1], [0, 0, 1, 1], [], []>} : vector<4x4xf32>, vector<4x192xf32>, vector<4x192xf32> -> vector<4x192xf32>
    %48 = arith.addf %43, %47 : vector<4x192xf32>
    %c0_50 = arith.constant 0 : index
    %c16_51 = arith.constant 16 : index
    %49 = vector.load %arg7[%c0_50, %c16_51] : memref<4x224xf32, #tpu.memory_space<vmem>>, vector<4x192xf32>
    %c3_52 = arith.constant 3 : index
    %c0_53 = arith.constant 0 : index
    %c0_54 = arith.constant 0 : index
    %50 = vector.load %arg4[%c3_52, %c0_53, %c0_54] : memref<5x4x4xf32, #tpu.memory_space<vmem>>, vector<1x4x4xf32>
    %51 = vector.shape_cast %50 : vector<1x4x4xf32> to vector<4x4xf32>
    %cst_55 = arith.constant dense<0.000000e+00> : vector<4x192xf32>
    %52 = tpu.matmul %51, %49, %cst_55 {dimension_numbers = #tpu.dot_dimension_numbers<[1], [0], [0], [1], [0, 0, 1, 1], [], []>} : vector<4x4xf32>, vector<4x192xf32>, vector<4x192xf32> -> vector<4x192xf32>
    %53 = arith.addf %48, %52 : vector<4x192xf32>
    %c0_56 = arith.constant 0 : index
    %c17_57 = arith.constant 17 : index
    %54 = vector.load %arg7[%c0_56, %c17_57] : memref<4x224xf32, #tpu.memory_space<vmem>>, vector<4x192xf32>
    %c4_58 = arith.constant 4 : index
    %c0_59 = arith.constant 0 : index
    %c0_60 = arith.constant 0 : index
    %55 = vector.load %arg4[%c4_58, %c0_59, %c0_60] : memref<5x4x4xf32, #tpu.memory_space<vmem>>, vector<1x4x4xf32>
    %56 = vector.shape_cast %55 : vector<1x4x4xf32> to vector<4x4xf32>
    %cst_61 = arith.constant dense<0.000000e+00> : vector<4x192xf32>
    %57 = tpu.matmul %56, %54, %cst_61 {dimension_numbers = #tpu.dot_dimension_numbers<[1], [0], [0], [1], [0, 0, 1, 1], [], []>} : vector<4x4xf32>, vector<4x192xf32>, vector<4x192xf32> -> vector<4x192xf32>
    %58 = arith.addf %53, %57 : vector<4x192xf32>
    %c0_62 = arith.constant 0 : index
    %c0_63 = arith.constant 0 : index
    %c34 = arith.constant 34 : index
    %59 = vector.load %arg1[%c0_62, %c0_63, %c34] : memref<1x4x256xf32, #tpu.memory_space<vmem>>, vector<1x4x192xf32>
    %60 = vector.shape_cast %59 : vector<1x4x192xf32> to vector<4x192xf32>
    %c0_64 = arith.constant 0 : index
    %c0_65 = arith.constant 0 : index
    %61 = vector.load %arg5[%c0_64, %c0_65] : memref<4x1xf32, #tpu.memory_space<vmem>>, vector<4x1xf32>
    %62 = vector.broadcast %61 : vector<4x1xf32> to vector<4x192xf32>
    %63 = arith.addf %58, %62 : vector<4x192xf32>
    %64 = arith.addf %63, %60 : vector<4x192xf32>
    %c0_66 = arith.constant 0 : index
    %c0_67 = arith.constant 0 : index
    %c0_68 = arith.constant 0 : index
    %65 = vector.load %arg6[%c0_66, %c0_67, %c0_68] : memref<1x4x192xf32, #tpu.memory_space<vmem>>, vector<1x4x192xf32>
    %66 = vector.shape_cast %65 : vector<1x4x192xf32> to vector<4x192xf32>
    %67 = vector.shape_cast %64 : vector<4x192xf32> to vector<1x4x192xf32>
    tpu.vector_store %arg6[%c0_66, %c0_67, %c0_68], %67 {strides = array<i32>} : memref<1x4x192xf32, #tpu.memory_space<vmem>>, vector<1x4x192xf32>,
    return
  }
  func.func @transform_0(%arg0: i32) -> (i32, i32, i32) {
    %c0_i32 = arith.constant 0 : i32
    %c0_i32_0 = arith.constant 0 : i32
    %c0_i32_1 = arith.constant 0 : i32
    return %arg0, %c0_i32, %c0_i32_0 : i32, i32, i32
  }
  func.func @transform_1(%arg0: i32) -> (i32, i32, i32) {
    %c0_i32 = arith.constant 0 : i32
    %c0_i32_0 = arith.constant 0 : i32
    %c0_i32_1 = arith.constant 0 : i32
    %c0_i32_2 = arith.constant 0 : i32
    return %c0_i32, %c0_i32_0, %c0_i32_1 : i32, i32, i32
  }
  func.func @transform_2(%arg0: i32) -> (i32, i32) {
    %c0_i32 = arith.constant 0 : i32
    %c0_i32_0 = arith.constant 0 : i32
    %c0_i32_1 = arith.constant 0 : i32
    return %c0_i32, %c0_i32_0 : i32, i32
  }
  func.func @transform_3(%arg0: i32) -> (i32, i32, i32) {
    %c0_i32 = arith.constant 0 : i32
    %c0_i32_0 = arith.constant 0 : i32
    %c0_i32_1 = arith.constant 0 : i32
    %c0_i32_2 = arith.constant 0 : i32
    return %c0_i32, %c0_i32_0, %c0_i32_1 : i32, i32, i32
  }
  func.func @transform_4(%arg0: i32) -> (i32, i32) {
    %c0_i32 = arith.constant 0 : i32
    %c0_i32_0 = arith.constant 0 : i32
    %c0_i32_1 = arith.constant 0 : i32
    return %c0_i32, %c0_i32_0 : i32, i32
  }
  func.func @transform_5(%arg0: i32) -> (i32, i32, i32) {
    %c0_i32 = arith.constant 0 : i32
    %c0_i32_0 = arith.constant 0 : i32
    %c0_i32_1 = arith.constant 0 : i32
    return %arg0, %c0_i32, %c0_i32_0 : i32, i32, i32
  }
}

</mosaic_0001>

<llo_original>
// kernel: tpu_custom_call.1
$region0: #{tpu_custom_call.1}
  #allocation0 [shape = 'u32[]', space=smem, size = 0x4, offset = 0x4, fixed_abs, tag = 'smem constant byte address 0x4 - core index']
  #allocation1 [shape = 'u32[144,128]{1,0:T(1,128)}', space=vmem, size = 0x12000, scoped, tag = 'internal scratch']
  #allocation2 [shape = 'f32[4,224]{1,0:T(4,128)}', space=vmem, size = 0x1000, scoped, tag = 'scratch operand']
  %s0 = inlined_call_operand.vmem [shape: f32[2,4,256], index: 0, kind: input, shape index: {}]
  %s1 = inlined_call_operand.vmem [shape: f32[5,4,4], index: 1, kind: input, shape index: {}]
  %s2 = inlined_call_operand.vmem [shape: f32[4,1], index: 2, kind: input, shape index: {}]
  %s3 = inlined_call_operand.vmem [shape: f32[5,4,4], index: 3, kind: input, shape index: {}]
  %s4 = inlined_call_operand.vmem [shape: f32[4,1], index: 4, kind: input, shape index: {}]
  %s5 = inlined_call_operand.hbm [shape: f32[2,4,192], index: 5, kind: output, shape index: {}]
  %s6 = sld [smem:[#allocation0]]
  $region53: #{tpu_custom_call.1} parent=0
    _
  %s8 = ssub.s32 1, %s6
  %s9 = scalar_select 0, %s8, %s6
  $region1: #{tpu_custom_call.1} parent=0
    #allocation3 [shape = 'u8[8192]{0}', space=vmem, size = 0x2000, scoped, tag = 'output window, operand 0']
    #allocation4 [shape = 's32[2]{0}', space=sflag, size = 0x8, scoped, tag = 'scoped memory for tpu_custom_call.1']
    %10 = vsyncpa [#allocation4], 0
    %s11 = scalar_lea.sflag [#allocation4], 1
    %12 = vsyncpa %s11, 0
    loop: start=0, step=1, limit=4
    $region2: #{tpu_custom_call.1} parent=1 // loop_pre_header
      _
    $region3: #{tpu_custom_call.1} parent=1 // loop_header
      %s14 = sphi 0, %s18
      %p15 = scmp.ge.s32.totalorder %s14, 4
      %s24 = sphi 0, %s26
      %s27 = sphi 0, %s24
      %s28 = sphi 0, %s27
      %s44 = sphi 0, %s28
      %s48 = sphi 0, %s48
      %s50 = sphi 0, %s48
      %s51 = sphi 0, %s50
      %s65 = sphi 0, %s51
      %s69 = sphi 0, %s69
      %s71 = sphi 0, %s69
      %s72 = sphi 0, %s71
      %s86 = sphi 0, %s72
      %s90 = sphi 0, %s90
      %s92 = sphi 0, %s90
      %s93 = sphi 0, %s92
      %s107 = sphi 0, %s93
      %s111 = sphi 0, %s111
      %s113 = sphi 0, %s111
      %s114 = sphi 0, %s113
      %s128 = sphi 0, %s114
      %s134 = sphi 0, %s136
      %s137 = sphi 0, %s134
      %s138 = sphi 0, %s137
      %s154 = sphi 0, %s138
    $region4: #{tpu_custom_call.1} parent=1 // loop_header_branch
      %17 = sbr.rel (%p15) target = $region8
    $region5: #{tpu_custom_call.1} parent=1 // loop_body
      %s19 = ssub.s32 %s14, 1
      %s20 = ssub.s32 %s14, 2
      %s21 = sadd.s32 %s14, 1
      %s22 = ssub.s32 %s14, %s21
      %p23 = scmp.eq.s32.totalorder %s22, 0
      %s25 = sadd.s32 %s24, 1
      %s26 = scalar_select %p23, %s24, %s25
      %p29 = pneg %p23
      %p30 = scmp.eq.s32.totalorder %s14, 1
      %p31 = por %p29, %p30
      %p32 = scmp.ne.s32.totalorder %s24, %s27
      %p33 = scmp.eq.s32.totalorder %s14, 0
      %p34 = por %p32, %p33
      %p35 = scmp.ne.s32.totalorder %s24, %s27
      %p36 = scmp.eq.s32.totalorder %s19, 1
      %p37 = por %p35, %p36
      %p38 = scmp.ne.s32.totalorder %s27, %s28
      %p39 = scmp.eq.s32.totalorder %s19, 0
      %p40 = por %p38, %p39
      %p41 = scmp.ne.s32.totalorder %s27, %s28
      %p42 = scmp.eq.s32.totalorder %s20, 1
      %p43 = por %p41, %p42
      %p45 = scmp.ne.s32.totalorder %s28, %s44
      %p46 = scmp.eq.s32.totalorder %s20, 0
      %p47 = por %p45, %p46
      %s49 = sadd.s32 %s48, 1
      %p52 = scmp.eq.s32.totalorder %s14, 1
      %p53 = scmp.ne.s32.totalorder %s48, %s50
      %p54 = scmp.eq.s32.totalorder %s14, 0
      %p55 = por %p53, %p54
      %p56 = scmp.ne.s32.totalorder %s48, %s50
      %p57 = scmp.eq.s32.totalorder %s19, 1
      %p58 = por %p56, %p57
      %p59 = scmp.ne.s32.totalorder %s50, %s51
      %p60 = scmp.eq.s32.totalorder %s19, 0
      %p61 = por %p59, %p60
      %p62 = scmp.ne.s32.totalorder %s50, %s51
      %p63 = scmp.eq.s32.totalorder %s20, 1
      %p64 = por %p62, %p63
      %p66 = scmp.ne.s32.totalorder %s51, %s65
      %p67 = scmp.eq.s32.totalorder %s20, 0
      %p68 = por %p66, %p67
      %s70 = sadd.s32 %s69, 1
      %p73 = scmp.eq.s32.totalorder %s14, 1
      %p74 = scmp.ne.s32.totalorder %s69, %s71
      %p75 = scmp.eq.s32.totalorder %s14, 0
      %p76 = por %p74, %p75
      %p77 = scmp.ne.s32.totalorder %s69, %s71
      %p78 = scmp.eq.s32.totalorder %s19, 1
      %p79 = por %p77, %p78
      %p80 = scmp.ne.s32.totalorder %s71, %s72
      %p81 = scmp.eq.s32.totalorder %s19, 0
      %p82 = por %p80, %p81
      %p83 = scmp.ne.s32.totalorder %s71, %s72
      %p84 = scmp.eq.s32.totalorder %s20, 1
      %p85 = por %p83, %p84
      %p87 = scmp.ne.s32.totalorder %s72, %s86
      %p88 = scmp.eq.s32.totalorder %s20, 0
      %p89 = por %p87, %p88
      %s91 = sadd.s32 %s90, 1
      %p94 = scmp.eq.s32.totalorder %s14, 1
      %p95 = scmp.ne.s32.totalorder %s90, %s92
      %p96 = scmp.eq.s32.totalorder %s14, 0
      %p97 = por %p95, %p96
      %p98 = scmp.ne.s32.totalorder %s90, %s92
      %p99 = scmp.eq.s32.totalorder %s19, 1
      %p100 = por %p98, %p99
      %p101 = scmp.ne.s32.totalorder %s92, %s93
      %p102 = scmp.eq.s32.totalorder %s19, 0
      %p103 = por %p101, %p102
      %p104 = scmp.ne.s32.totalorder %s92, %s93
      %p105 = scmp.eq.s32.totalorder %s20, 1
      %p106 = por %p104, %p105
      %p108 = scmp.ne.s32.totalorder %s93, %s107
      %p109 = scmp.eq.s32.totalorder %s20, 0
      %p110 = por %p108, %p109
      %s112 = sadd.s32 %s111, 1
      %p115 = scmp.eq.s32.totalorder %s14, 1
      %p116 = scmp.ne.s32.totalorder %s111, %s113
      %p117 = scmp.eq.s32.totalorder %s14, 0
      %p118 = por %p116, %p117
      %p119 = scmp.ne.s32.totalorder %s111, %s113
      %p120 = scmp.eq.s32.totalorder %s19, 1
      %p121 = por %p119, %p120
      %p122 = scmp.ne.s32.totalorder %s113, %s114
      %p123 = scmp.eq.s32.totalorder %s19, 0
      %p124 = por %p122, %p123
      %p125 = scmp.ne.s32.totalorder %s113, %s114
      %p126 = scmp.eq.s32.totalorder %s20, 1
      %p127 = por %p125, %p126
      %p129 = scmp.ne.s32.totalorder %s114, %s128
      %p130 = scmp.eq.s32.totalorder %s20, 0
      %p131 = por %p129, %p130
      %s132 = ssub.s32 %s14, %s21
      %p133 = scmp.eq.s32.totalorder %s132, 0
      %s135 = sadd.s32 %s134, 1
      %s136 = scalar_select %p133, %s134, %s135
      %p139 = pneg %p133
      %p140 = scmp.eq.s32.totalorder %s14, 1
      %p141 = por %p139, %p140
      %p142 = scmp.ne.s32.totalorder %s134, %s137
      %p143 = scmp.eq.s32.totalorder %s14, 0
      %p144 = por %p142, %p143
      %p145 = scmp.ne.s32.totalorder %s134, %s137
      %p146 = scmp.eq.s32.totalorder %s19, 1
      %p147 = por %p145, %p146
      %p148 = scmp.ne.s32.totalorder %s137, %s138
      %p149 = scmp.eq.s32.totalorder %s19, 0
      %p150 = por %p148, %p149
      %p151 = scmp.ne.s32.totalorder %s137, %s138
      %p152 = scmp.eq.s32.totalorder %s20, 1
      %p153 = por %p151, %p152
      %p155 = scmp.ne.s32.totalorder %s138, %s154
      %p156 = scmp.eq.s32.totalorder %s20, 0
      %p157 = por %p155, %p156
      %p158 = scmp.le.s32.totalorder 1, %s14
      %p159 = scmp.lt.s32.totalorder %s14, 3
      %p160 = pnand %p158, %p159
      %p161 = pneg %p160
      // Predicated region
      $region9: #{tpu_custom_call.1} parent=5 // pred_check
        _
      $region10: #{tpu_custom_call.1} parent=5 // pred_check_branch
        %163 = sbr.rel (%p160) target = $region12
      $region11: #{tpu_custom_call.1} parent=5 // pred_region
        %s164 = ssub.s32 %s14, 1
        // Predicated region
        $region13: #{tpu_custom_call.1} parent=11 // pred_check
          %p165 = pneg %p61
        $region14: #{tpu_custom_call.1} parent=11 // pred_check_branch
          %167 = sbr.rel (%p165) target = $region16
        $region15: #{tpu_custom_call.1} parent=11 // pred_region
          _
        $region16: #{tpu_custom_call.1} parent=11 // pred_fallthru
          _
        // Predicated region
        $region17: #{tpu_custom_call.1} parent=11 // pred_check
          %p168 = pneg %p82
        $region18: #{tpu_custom_call.1} parent=11 // pred_check_branch
          %170 = sbr.rel (%p168) target = $region20
        $region19: #{tpu_custom_call.1} parent=11 // pred_region
          _
        $region20: #{tpu_custom_call.1} parent=11 // pred_fallthru
          _
        // Predicated region
        $region21: #{tpu_custom_call.1} parent=11 // pred_check
          %p171 = pneg %p103
        $region22: #{tpu_custom_call.1} parent=11 // pred_check_branch
          %173 = sbr.rel (%p171) target = $region24
        $region23: #{tpu_custom_call.1} parent=11 // pred_region
          _
        $region24: #{tpu_custom_call.1} parent=11 // pred_fallthru
          _
        // Predicated region
        $region25: #{tpu_custom_call.1} parent=11 // pred_check
          %p174 = pneg %p124
        $region26: #{tpu_custom_call.1} parent=11 // pred_check_branch
          %176 = sbr.rel (%p174) target = $region28
        $region27: #{tpu_custom_call.1} parent=11 // pred_region
          _
        $region28: #{tpu_custom_call.1} parent=11 // pred_fallthru
          _
      $region12: #{tpu_custom_call.1} parent=5 // pred_fallthru
        _
      %p177 = scmp.lt.s32.totalorder %s14, 2
      // Predicated region
      $region29: #{tpu_custom_call.1} parent=5 // pred_check
        %p178 = pneg %p177
      $region30: #{tpu_custom_call.1} parent=5 // pred_check_branch
        %180 = sbr.rel (%p178) target = $region32
      $region31: #{tpu_custom_call.1} parent=5 // pred_region
        // Predicated region
        $region33: #{tpu_custom_call.1} parent=31 // pred_check
          %p181 = pneg %p34
        $region34: #{tpu_custom_call.1} parent=31 // pred_check_branch
          %183 = sbr.rel (%p181) target = $region36
        $region35: #{tpu_custom_call.1} parent=31 // pred_region
          %p184 = scmp.lt.s32.totalorder %s14, 1
          %s185 = scalar_select %p184, %s14, 1
          %s186 = smul.addr %s185, 2
          %s187 = smul.addr %s186, 4
          %s188 = scalar_lea.vmem %s0, %s187
        $region36: #{tpu_custom_call.1} parent=31 // pred_fallthru
          _
      $region32: #{tpu_custom_call.1} parent=5 // pred_fallthru
        _
      %p189 = scmp.le.s32.totalorder 1, %s14
      %p190 = scmp.lt.s32.totalorder %s14, 3
      %p191 = pnand %p189, %p190
      %p192 = pneg %p191
      // Predicated region
      $region37: #{tpu_custom_call.1} parent=5 // pred_check
        _
      $region38: #{tpu_custom_call.1} parent=5 // pred_check_branch
        %194 = sbr.rel (%p191) target = $region40
      $region39: #{tpu_custom_call.1} parent=5 // pred_region
        %s195 = ssub.s32 %s14, 1
        %p196 = scmp.lt.s32.totalorder %s19, 1
        %s197 = scalar_select %p196, %s19, 1
        %s198 = smul.addr %s197, 2
        %s199 = smul.addr %s198, 4
        %s200 = scalar_lea.vmem %s0, %s199
        %p201 = pneg %p40
        %p202 = pneg %p37
        %p203 = pneg %p61
        %p204 = pneg %p58
        %p205 = pneg %p82
        %p206 = pneg %p79
        %p207 = pneg %p103
        %p208 = pneg %p100
        %p209 = pneg %p124
        %p210 = pneg %p121
        %p211 = pneg %p150
        %p212 = pneg %p147
        %s213 = sand.u32 %s137, 1
        %s214 = scalar_lea.sflag [#allocation4], %s213
        %s215 = sand.u32 %s137, 1
        %s216 = smul.addr %s215, 8
        %s217 = scalar_lea.vmem [#allocation3], %s216
        %p218 = scmp.lt.s32.totalorder %s19, 1
        %s219 = scalar_select %p218, %s19, 1
        %s220 = smul.addr %s219, 2
        %s221 = smul.addr %s220, 4
        %s222 = scalar_lea.vmem %s0, %s221
        %v223 = vld [vmem:[%s222] sm:$0xff]
        %v224 = vld [vmem:[%s1] sm:$0xf]
        %s225 = scalar_lea.vmem %s1, 4
        %v226 = vld [vmem:[%s225] sm:$0xf]
        %v228 = vcombine.high %v223, %v223
        %229 = vrot.lane.b32.xlu0 %v223, 127
        %v230 = vpop.permute.xlu0 %229
        %231 = vrot.lane.b32.xlu0 %v228, 127
        %v232 = vpop.permute.xlu0 %231
        %vm233 = vcmask 1039360
        %v234 = vsel %vm233, %v230, %v232
        %vm235 = vcmask 31744
        %v237 = vsel %vm235, %v226, 0
        %vm239 = vcmask 1043456
        %v240 = vsel %vm239, %v234, 0
        %v242 = vsel %vm239, %v232, 0
        %244 = vmatprep.subr.mxu0 %v242
        %245 = vmatpush1.msra.mxu0 %v240
        %246 = vmatprep.subr.mxu0 0.0
        %247 = vmatpush1.msra.mxu0 0.0
        %248 = vmatprep.subr.mxu0 0.0
        %249 = vmatpush1.msra.mxu0 0.0
        %250 = vmatprep.subr.mxu0 0.0
        %251 = vmatpush1.msra.mxu0 0.0
        %252 = vmatprep.subr.mxu0 0.0
        %253 = vmatpush1.msra.mxu0 0.0
        %254 = vmatprep.subr.mxu0 0.0
        %255 = vmatpush1.msra.mxu0 0.0
        %256 = vmatprep.subr.mxu0 0.0
        %257 = vmatpush1.msra.mxu0 0.0
        %258 = vmatprep.subr.mxu0 0.0
        %259 = vmatpush1.msra.mxu0 0.0
        %260 = vmatprep.subr.mxu0 0.0
        %261 = vmatpush1.msra.mxu0 0.0
        %262 = vmatprep.subr.mxu0 0.0
        %263 = vmatpush1.msra.mxu0 0.0
        %264 = vmatprep.subr.mxu0 0.0
        %265 = vmatpush1.msra.mxu0 0.0
        %266 = vmatprep.subr.mxu0 0.0
        %267 = vmatpush1.msra.mxu0 0.0
        %268 = vmatprep.subr.mxu0 0.0
        %269 = vmatpush1.msra.mxu0 0.0
        %270 = vmatprep.subr.mxu0 0.0
        %271 = vmatpush1.msra.mxu0 0.0
        %272 = vmatprep.subr.mxu0 0.0
        %273 = vmatpush1.msra.mxu0 0.0
        %274 = vmatprep.subr.mxu0 0.0
        %275 = vmatpush1.msra.mxu0 0.0
        %276 = vmatprep.subr.mxu0 0.0
        %277 = vmatpush1.msra.mxu0 0.0
        %278 = vmatprep.subr.mxu0 0.0
        %279 = vmatpush1.msra.mxu0 0.0
        %280 = vmatprep.subr.mxu0 0.0
        %281 = vmatpush1.msra.mxu0 0.0
        %282 = vmatprep.subr.mxu0 0.0
        %283 = vmatpush1.msra.mxu0 0.0
        %284 = vmatprep.subr.mxu0 0.0
        %285 = vmatpush1.msra.mxu0 0.0
        %286 = vmatprep.subr.mxu0 0.0
        %287 = vmatpush1.msra.mxu0 0.0
        %288 = vmatprep.subr.mxu0 0.0
        %289 = vmatpush1.msra.mxu0 0.0
        %290 = vmatprep.subr.mxu0 0.0
        %291 = vmatpush1.msra.mxu0 0.0
        %292 = vmatprep.subr.mxu0 0.0
        %293 = vmatpush1.msra.mxu0 0.0
        %294 = vmatprep.subr.mxu0 0.0
        %295 = vmatpush1.msra.mxu0 0.0
        %296 = vmatprep.subr.mxu0 0.0
        %297 = vmatpush1.msra.mxu0 0.0
        %298 = vmatprep.subr.mxu0 0.0
        %299 = vmatpush1.msra.mxu0 0.0
        %300 = vmatprep.subr.mxu0 0.0
        %301 = vmatpush1.msra.mxu0 0.0
        %302 = vmatprep.subr.mxu0 0.0
        %303 = vmatpush1.msra.mxu0 0.0
        %304 = vmatprep.subr.mxu0 0.0
        %305 = vmatpush1.msra.mxu0 0.0
        %306 = vmatprep.subr.mxu0 0.0
        %307 = vmatpush1.msra.mxu0 0.0
        %308 = vmatprep.mubr.f32.mxu0 0.0
        %309 = vmatmul.mubr.f32.gmra.mrb[0].mxu0 %v237
        %v310 = vpop.f32.mrb[0].mxu0
        %v311 = vadd.f32 0.0, %v310
        %v312 = vpop.f32.mrb[0].mxu0
        %v313 = vadd.f32 0.0, %v312
        %314 = vdwg.mxu0
        %v316 = vsel %vm235, %v224, 0
        %v318 = vsel %vm239, %v223, 0
        %v320 = vsel %vm239, %v228, 0
        %322 = vmatprep.subr.mxu0 %v320
        %323 = vmatpush1.msra.mxu0 %v318
        %324 = vmatprep.subr.mxu0 0.0
        %325 = vmatpush1.msra.mxu0 0.0
        %326 = vmatprep.subr.mxu0 0.0
        %327 = vmatpush1.msra.mxu0 0.0
        %328 = vmatprep.subr.mxu0 0.0
        %329 = vmatpush1.msra.mxu0 0.0
        %330 = vmatprep.subr.mxu0 0.0
        %331 = vmatpush1.msra.mxu0 0.0
        %332 = vmatprep.subr.mxu0 0.0
        %333 = vmatpush1.msra.mxu0 0.0
        %334 = vmatprep.subr.mxu0 0.0
        %335 = vmatpush1.msra.mxu0 0.0
        %336 = vmatprep.subr.mxu0 0.0
        %337 = vmatpush1.msra.mxu0 0.0
        %338 = vmatprep.subr.mxu0 0.0
        %339 = vmatpush1.msra.mxu0 0.0
        %340 = vmatprep.subr.mxu0 0.0
        %341 = vmatpush1.msra.mxu0 0.0
        %342 = vmatprep.subr.mxu0 0.0
        %343 = vmatpush1.msra.mxu0 0.0
        %344 = vmatprep.subr.mxu0 0.0
        %345 = vmatpush1.msra.mxu0 0.0
        %346 = vmatprep.subr.mxu0 0.0
        %347 = vmatpush1.msra.mxu0 0.0
        %348 = vmatprep.subr.mxu0 0.0
        %349 = vmatpush1.msra.mxu0 0.0
        %350 = vmatprep.subr.mxu0 0.0
        %351 = vmatpush1.msra.mxu0 0.0
        %352 = vmatprep.subr.mxu0 0.0
        %353 = vmatpush1.msra.mxu0 0.0
        %354 = vmatprep.subr.mxu0 0.0
        %355 = vmatpush1.msra.mxu0 0.0
        %356 = vmatprep.subr.mxu0 0.0
        %357 = vmatpush1.msra.mxu0 0.0
        %358 = vmatprep.subr.mxu0 0.0
        %359 = vmatpush1.msra.mxu0 0.0
        %360 = vmatprep.subr.mxu0 0.0
        %361 = vmatpush1.msra.mxu0 0.0
        %362 = vmatprep.subr.mxu0 0.0
        %363 = vmatpush1.msra.mxu0 0.0
        %364 = vmatprep.subr.mxu0 0.0
        %365 = vmatpush1.msra.mxu0 0.0
        %366 = vmatprep.subr.mxu0 0.0
        %367 = vmatpush1.msra.mxu0 0.0
        %368 = vmatprep.subr.mxu0 0.0
        %369 = vmatpush1.msra.mxu0 0.0
        %370 = vmatprep.subr.mxu0 0.0
        %371 = vmatpush1.msra.mxu0 0.0
        %372 = vmatprep.subr.mxu0 0.0
        %373 = vmatpush1.msra.mxu0 0.0
        %374 = vmatprep.subr.mxu0 0.0
        %375 = vmatpush1.msra.mxu0 0.0
        %376 = vmatprep.subr.mxu0 0.0
        %377 = vmatpush1.msra.mxu0 0.0
        %378 = vmatprep.subr.mxu0 0.0
        %379 = vmatpush1.msra.mxu0 0.0
        %380 = vmatprep.subr.mxu0 0.0
        %381 = vmatpush1.msra.mxu0 0.0
        %382 = vmatprep.subr.mxu0 0.0
        %383 = vmatpush1.msra.mxu0 0.0
        %384 = vmatprep.subr.mxu0 0.0
        %385 = vmatpush1.msra.mxu0 0.0
        %386 = vmatprep.mubr.f32.mxu0 0.0
        %387 = vmatmul.mubr.f32.gmra.mrb[0].mxu0 %v316
        %v388 = vpop.f32.mrb[0].mxu0
        %v389 = vadd.f32 %v311, %v388
        %v390 = vpop.f32.mrb[0].mxu0
        %v391 = vadd.f32 %v313, %v390
        %392 = vdwg.mxu0
        %v393 = vld [vmem:[%s222] sm:$0xff]
        %s394 = scalar_lea.vmem %s1, 8
        %v395 = vld [vmem:[%s394] sm:$0xf]
        %v397 = vcombine.high %v393, %v393
        %398 = vrot.lane.b32.xlu0 %v393, 126
        %v399 = vpop.permute.xlu0 %398
        %400 = vrot.lane.b32.xlu0 %v397, 126
        %v401 = vpop.permute.xlu0 %400
        %vm402 = vcmask 1031168
        %v403 = vsel %vm402, %v399, %v401
        %v405 = vsel %vm235, %v395, 0
        %v407 = vsel %vm239, %v403, 0
        %v409 = vsel %vm239, %v401, 0
        %411 = vmatprep.subr.mxu0 %v409
        %412 = vmatpush1.msra.mxu0 %v407
        %413 = vmatprep.subr.mxu0 0.0
        %414 = vmatpush1.msra.mxu0 0.0
        %415 = vmatprep.subr.mxu0 0.0
        %416 = vmatpush1.msra.mxu0 0.0
        %417 = vmatprep.subr.mxu0 0.0
        %418 = vmatpush1.msra.mxu0 0.0
        %419 = vmatprep.subr.mxu0 0.0
        %420 = vmatpush1.msra.mxu0 0.0
        %421 = vmatprep.subr.mxu0 0.0
        %422 = vmatpush1.msra.mxu0 0.0
        %423 = vmatprep.subr.mxu0 0.0
        %424 = vmatpush1.msra.mxu0 0.0
        %425 = vmatprep.subr.mxu0 0.0
        %426 = vmatpush1.msra.mxu0 0.0
        %427 = vmatprep.subr.mxu0 0.0
        %428 = vmatpush1.msra.mxu0 0.0
        %429 = vmatprep.subr.mxu0 0.0
        %430 = vmatpush1.msra.mxu0 0.0
        %431 = vmatprep.subr.mxu0 0.0
        %432 = vmatpush1.msra.mxu0 0.0
        %433 = vmatprep.subr.mxu0 0.0
        %434 = vmatpush1.msra.mxu0 0.0
        %435 = vmatprep.subr.mxu0 0.0
        %436 = vmatpush1.msra.mxu0 0.0
        %437 = vmatprep.subr.mxu0 0.0
        %438 = vmatpush1.msra.mxu0 0.0
        %439 = vmatprep.subr.mxu0 0.0
        %440 = vmatpush1.msra.mxu0 0.0
        %441 = vmatprep.subr.mxu0 0.0
        %442 = vmatpush1.msra.mxu0 0.0
        %443 = vmatprep.subr.mxu0 0.0
        %444 = vmatpush1.msra.mxu0 0.0
        %445 = vmatprep.subr.mxu0 0.0
        %446 = vmatpush1.msra.mxu0 0.0
        %447 = vmatprep.subr.mxu0 0.0
        %448 = vmatpush1.msra.mxu0 0.0
        %449 = vmatprep.subr.mxu0 0.0
        %450 = vmatpush1.msra.mxu0 0.0
        %451 = vmatprep.subr.mxu0 0.0
        %452 = vmatpush1.msra.mxu0 0.0
        %453 = vmatprep.subr.mxu0 0.0
        %454 = vmatpush1.msra.mxu0 0.0
        %455 = vmatprep.subr.mxu0 0.0
        %456 = vmatpush1.msra.mxu0 0.0
        %457 = vmatprep.subr.mxu0 0.0
        %458 = vmatpush1.msra.mxu0 0.0
        %459 = vmatprep.subr.mxu0 0.0
        %460 = vmatpush1.msra.mxu0 0.0
        %461 = vmatprep.subr.mxu0 0.0
        %462 = vmatpush1.msra.mxu0 0.0
        %463 = vmatprep.subr.mxu0 0.0
        %464 = vmatpush1.msra.mxu0 0.0
        %465 = vmatprep.subr.mxu0 0.0
        %466 = vmatpush1.msra.mxu0 0.0
        %467 = vmatprep.subr.mxu0 0.0
        %468 = vmatpush1.msra.mxu0 0.0
        %469 = vmatprep.subr.mxu0 0.0
        %470 = vmatpush1.msra.mxu0 0.0
        %471 = vmatprep.subr.mxu0 0.0
        %472 = vmatpush1.msra.mxu0 0.0
        %473 = vmatprep.subr.mxu0 0.0
        %474 = vmatpush1.msra.mxu0 0.0
        %475 = vmatprep.mubr.f32.mxu0 0.0
        %476 = vmatmul.mubr.f32.gmra.mrb[0].mxu0 %v405
        %v477 = vpop.f32.mrb[0].mxu0
        %v478 = vadd.f32 0.0, %v477
        %v479 = vpop.f32.mrb[0].mxu0
        %v480 = vadd.f32 0.0, %v479
        %481 = vdwg.mxu0
        %v482 = vadd.f32 %v389, %v478
        %v483 = vadd.f32 %v391, %v480
        %v484 = vld [vmem:[%s222] sm:$0xff]
        %s485 = scalar_lea.vmem %s1, 12
        %v486 = vld [vmem:[%s485] sm:$0xf]
        %v488 = vcombine.high %v484, %v484
        %489 = vrot.lane.b32.xlu0 %v484, 112
        %v490 = vpop.permute.xlu0 %489
        %491 = vrot.lane.b32.xlu0 %v488, 112
        %v492 = vpop.permute.xlu0 %491
        %vm493 = vcmask 916480
        %v494 = vsel %vm493, %v490, %v492
        %v496 = vsel %vm235, %v486, 0
        %v498 = vsel %vm239, %v494, 0
        %v500 = vsel %vm239, %v492, 0
        %502 = vmatprep.subr.mxu0 %v500
        %503 = vmatpush1.msra.mxu0 %v498
        %504 = vmatprep.subr.mxu0 0.0
        %505 = vmatpush1.msra.mxu0 0.0
        %506 = vmatprep.subr.mxu0 0.0
        %507 = vmatpush1.msra.mxu0 0.0
        %508 = vmatprep.subr.mxu0 0.0
        %509 = vmatpush1.msra.mxu0 0.0
        %510 = vmatprep.subr.mxu0 0.0
        %511 = vmatpush1.msra.mxu0 0.0
        %512 = vmatprep.subr.mxu0 0.0
        %513 = vmatpush1.msra.mxu0 0.0
        %514 = vmatprep.subr.mxu0 0.0
        %515 = vmatpush1.msra.mxu0 0.0
        %516 = vmatprep.subr.mxu0 0.0
        %517 = vmatpush1.msra.mxu0 0.0
        %518 = vmatprep.subr.mxu0 0.0
        %519 = vmatpush1.msra.mxu0 0.0
        %520 = vmatprep.subr.mxu0 0.0
        %521 = vmatpush1.msra.mxu0 0.0
        %522 = vmatprep.subr.mxu0 0.0
        %523 = vmatpush1.msra.mxu0 0.0
        %524 = vmatprep.subr.mxu0 0.0
        %525 = vmatpush1.msra.mxu0 0.0
        %526 = vmatprep.subr.mxu0 0.0
        %527 = vmatpush1.msra.mxu0 0.0
        %528 = vmatprep.subr.mxu0 0.0
        %529 = vmatpush1.msra.mxu0 0.0
        %530 = vmatprep.subr.mxu0 0.0
        %531 = vmatpush1.msra.mxu0 0.0
        %532 = vmatprep.subr.mxu0 0.0
        %533 = vmatpush1.msra.mxu0 0.0
        %534 = vmatprep.subr.mxu0 0.0
        %535 = vmatpush1.msra.mxu0 0.0
        %536 = vmatprep.subr.mxu0 0.0
        %537 = vmatpush1.msra.mxu0 0.0
        %538 = vmatprep.subr.mxu0 0.0
        %539 = vmatpush1.msra.mxu0 0.0
        %540 = vmatprep.subr.mxu0 0.0
        %541 = vmatpush1.msra.mxu0 0.0
        %542 = vmatprep.subr.mxu0 0.0
        %543 = vmatpush1.msra.mxu0 0.0
        %544 = vmatprep.subr.mxu0 0.0
        %545 = vmatpush1.msra.mxu0 0.0
        %546 = vmatprep.subr.mxu0 0.0
        %547 = vmatpush1.msra.mxu0 0.0
        %548 = vmatprep.subr.mxu0 0.0
        %549 = vmatpush1.msra.mxu0 0.0
        %550 = vmatprep.subr.mxu0 0.0
        %551 = vmatpush1.msra.mxu0 0.0
        %552 = vmatprep.subr.mxu0 0.0
        %553 = vmatpush1.msra.mxu0 0.0
        %554 = vmatprep.subr.mxu0 0.0
        %555 = vmatpush1.msra.mxu0 0.0
        %556 = vmatprep.subr.mxu0 0.0
        %557 = vmatpush1.msra.mxu0 0.0
        %558 = vmatprep.subr.mxu0 0.0
        %559 = vmatpush1.msra.mxu0 0.0
        %560 = vmatprep.subr.mxu0 0.0
        %561 = vmatpush1.msra.mxu0 0.0
        %562 = vmatprep.subr.mxu0 0.0
        %563 = vmatpush1.msra.mxu0 0.0
        %564 = vmatprep.subr.mxu0 0.0
        %565 = vmatpush1.msra.mxu0 0.0
        %566 = vmatprep.mubr.f32.mxu0 0.0
        %567 = vmatmul.mubr.f32.gmra.mrb[0].mxu0 %v496
        %v568 = vpop.f32.mrb[0].mxu0
        %v569 = vadd.f32 0.0, %v568
        %v570 = vpop.f32.mrb[0].mxu0
        %v571 = vadd.f32 0.0, %v570
        %572 = vdwg.mxu0
        %v573 = vadd.f32 %v482, %v569
        %v574 = vadd.f32 %v483, %v571
        %v575 = vld [vmem:[%s222] sm:$0xff]
        %s576 = scalar_lea.vmem %s1, 16
        %v577 = vld [vmem:[%s576] sm:$0xf]
        %v579 = vcombine.high %v575, %v575
        %580 = vrot.lane.b32.xlu0 %v575, 111
        %v581 = vpop.permute.xlu0 %580
        %582 = vrot.lane.b32.xlu0 %v579, 111
        %v583 = vpop.permute.xlu0 %582
        %vm584 = vcmask 908288
        %v585 = vsel %vm584, %v581, %v583
        %v587 = vsel %vm235, %v577, 0
        %v589 = vsel %vm239, %v585, 0
        %v591 = vsel %vm239, %v583, 0
        %593 = vmatprep.subr.mxu0 %v591
        %594 = vmatpush1.msra.mxu0 %v589
        %595 = vmatprep.subr.mxu0 0.0
        %596 = vmatpush1.msra.mxu0 0.0
        %597 = vmatprep.subr.mxu0 0.0
        %598 = vmatpush1.msra.mxu0 0.0
        %599 = vmatprep.subr.mxu0 0.0
        %600 = vmatpush1.msra.mxu0 0.0
        %601 = vmatprep.subr.mxu0 0.0
        %602 = vmatpush1.msra.mxu0 0.0
        %603 = vmatprep.subr.mxu0 0.0
        %604 = vmatpush1.msra.mxu0 0.0
        %605 = vmatprep.subr.mxu0 0.0
        %606 = vmatpush1.msra.mxu0 0.0
        %607 = vmatprep.subr.mxu0 0.0
        %608 = vmatpush1.msra.mxu0 0.0
        %609 = vmatprep.subr.mxu0 0.0
        %610 = vmatpush1.msra.mxu0 0.0
        %611 = vmatprep.subr.mxu0 0.0
        %612 = vmatpush1.msra.mxu0 0.0
        %613 = vmatprep.subr.mxu0 0.0
        %614 = vmatpush1.msra.mxu0 0.0
        %615 = vmatprep.subr.mxu0 0.0
        %616 = vmatpush1.msra.mxu0 0.0
        %617 = vmatprep.subr.mxu0 0.0
        %618 = vmatpush1.msra.mxu0 0.0
        %619 = vmatprep.subr.mxu0 0.0
        %620 = vmatpush1.msra.mxu0 0.0
        %621 = vmatprep.subr.mxu0 0.0
        %622 = vmatpush1.msra.mxu0 0.0
        %623 = vmatprep.subr.mxu0 0.0
        %624 = vmatpush1.msra.mxu0 0.0
        %625 = vmatprep.subr.mxu0 0.0
        %626 = vmatpush1.msra.mxu0 0.0
        %627 = vmatprep.subr.mxu0 0.0
        %628 = vmatpush1.msra.mxu0 0.0
        %629 = vmatprep.subr.mxu0 0.0
        %630 = vmatpush1.msra.mxu0 0.0
        %631 = vmatprep.subr.mxu0 0.0
        %632 = vmatpush1.msra.mxu0 0.0
        %633 = vmatprep.subr.mxu0 0.0
        %634 = vmatpush1.msra.mxu0 0.0
        %635 = vmatprep.subr.mxu0 0.0
        %636 = vmatpush1.msra.mxu0 0.0
        %637 = vmatprep.subr.mxu0 0.0
        %638 = vmatpush1.msra.mxu0 0.0
        %639 = vmatprep.subr.mxu0 0.0
        %640 = vmatpush1.msra.mxu0 0.0
        %641 = vmatprep.subr.mxu0 0.0
        %642 = vmatpush1.msra.mxu0 0.0
        %643 = vmatprep.subr.mxu0 0.0
        %644 = vmatpush1.msra.mxu0 0.0
        %645 = vmatprep.subr.mxu0 0.0
        %646 = vmatpush1.msra.mxu0 0.0
        %647 = vmatprep.subr.mxu0 0.0
        %648 = vmatpush1.msra.mxu0 0.0
        %649 = vmatprep.subr.mxu0 0.0
        %650 = vmatpush1.msra.mxu0 0.0
        %651 = vmatprep.subr.mxu0 0.0
        %652 = vmatpush1.msra.mxu0 0.0
        %653 = vmatprep.subr.mxu0 0.0
        %654 = vmatpush1.msra.mxu0 0.0
        %655 = vmatprep.subr.mxu0 0.0
        %656 = vmatpush1.msra.mxu0 0.0
        %657 = vmatprep.mubr.f32.mxu0 0.0
        %658 = vmatmul.mubr.f32.gmra.mrb[0].mxu0 %v587
        %v659 = vpop.f32.mrb[0].mxu0
        %v660 = vadd.f32 0.0, %v659
        %v661 = vpop.f32.mrb[0].mxu0
        %v662 = vadd.f32 0.0, %v661
        %663 = vdwg.mxu0
        %v664 = vadd.f32 %v573, %v660
        %v665 = vadd.f32 %v574, %v662
        %v666 = vld [vmem:[%s2] sm:$0xf]
        %668 = vset.pattern.permute.xlu0 0
        %669 = vperm.xlu0 %668, %v666
        %v670 = vpop.permute.xlu0 %669
        %v672 = vadd.f32 %v664, %v670
        %v673 = vadd.f32 %v665, %v670
        %v674 = vmax.f32 %v672, 0.0
        %v675 = vmax.f32 %v673, 0.0
        %v678 = vcombine.low %v674, %v675
        %vm680 = vcmask 785412
        %vm681 = vmor %vm680, %vm239
        %682 = vst.msk [vmem:[#allocation2] sm:$0xff] %vm681, %v678
        %v683 = vld [vmem:[#allocation2] sm:$0xff]
        %v684 = vld [vmem:[%s3] sm:$0xf]
        %s685 = scalar_lea.vmem %s3, 4
        %v686 = vld [vmem:[%s685] sm:$0xf]
        %v688 = vcombine.high %v683, %v683
        %689 = vrot.lane.b32.xlu0 %v683, 127
        %v690 = vpop.permute.xlu0 %689
        %691 = vrot.lane.b32.xlu0 %v688, 127
        %v692 = vpop.permute.xlu0 %691
        %v693 = vsel %vm233, %v690, %v692
        %v695 = vsel %vm235, %v686, 0
        %v697 = vsel %vm239, %v693, 0
        %v699 = vsel %vm239, %v692, 0
        %701 = vmatprep.subr.mxu0 %v699
        %702 = vmatpush1.msra.mxu0 %v697
        %703 = vmatprep.subr.mxu0 0.0
        %704 = vmatpush1.msra.mxu0 0.0
        %705 = vmatprep.subr.mxu0 0.0
        %706 = vmatpush1.msra.mxu0 0.0
        %707 = vmatprep.subr.mxu0 0.0
        %708 = vmatpush1.msra.mxu0 0.0
        %709 = vmatprep.subr.mxu0 0.0
        %710 = vmatpush1.msra.mxu0 0.0
        %711 = vmatprep.subr.mxu0 0.0
        %712 = vmatpush1.msra.mxu0 0.0
        %713 = vmatprep.subr.mxu0 0.0
        %714 = vmatpush1.msra.mxu0 0.0
        %715 = vmatprep.subr.mxu0 0.0
        %716 = vmatpush1.msra.mxu0 0.0
        %717 = vmatprep.subr.mxu0 0.0
        %718 = vmatpush1.msra.mxu0 0.0
        %719 = vmatprep.subr.mxu0 0.0
        %720 = vmatpush1.msra.mxu0 0.0
        %721 = vmatprep.subr.mxu0 0.0
        %722 = vmatpush1.msra.mxu0 0.0
        %723 = vmatprep.subr.mxu0 0.0
        %724 = vmatpush1.msra.mxu0 0.0
        %725 = vmatprep.subr.mxu0 0.0
        %726 = vmatpush1.msra.mxu0 0.0
        %727 = vmatprep.subr.mxu0 0.0
        %728 = vmatpush1.msra.mxu0 0.0
        %729 = vmatprep.subr.mxu0 0.0
        %730 = vmatpush1.msra.mxu0 0.0
        %731 = vmatprep.subr.mxu0 0.0
        %732 = vmatpush1.msra.mxu0 0.0
        %733 = vmatprep.subr.mxu0 0.0
        %734 = vmatpush1.msra.mxu0 0.0
        %735 = vmatprep.subr.mxu0 0.0
        %736 = vmatpush1.msra.mxu0 0.0
        %737 = vmatprep.subr.mxu0 0.0
        %738 = vmatpush1.msra.mxu0 0.0
        %739 = vmatprep.subr.mxu0 0.0
        %740 = vmatpush1.msra.mxu0 0.0
        %741 = vmatprep.subr.mxu0 0.0
        %742 = vmatpush1.msra.mxu0 0.0
        %743 = vmatprep.subr.mxu0 0.0
        %744 = vmatpush1.msra.mxu0 0.0
        %745 = vmatprep.subr.mxu0 0.0
        %746 = vmatpush1.msra.mxu0 0.0
        %747 = vmatprep.subr.mxu0 0.0
        %748 = vmatpush1.msra.mxu0 0.0
        %749 = vmatprep.subr.mxu0 0.0
        %750 = vmatpush1.msra.mxu0 0.0
        %751 = vmatprep.subr.mxu0 0.0
        %752 = vmatpush1.msra.mxu0 0.0
        %753 = vmatprep.subr.mxu0 0.0
        %754 = vmatpush1.msra.mxu0 0.0
        %755 = vmatprep.subr.mxu0 0.0
        %756 = vmatpush1.msra.mxu0 0.0
        %757 = vmatprep.subr.mxu0 0.0
        %758 = vmatpush1.msra.mxu0 0.0
        %759 = vmatprep.subr.mxu0 0.0
        %760 = vmatpush1.msra.mxu0 0.0
        %761 = vmatprep.subr.mxu0 0.0
        %762 = vmatpush1.msra.mxu0 0.0
        %763 = vmatprep.subr.mxu0 0.0
        %764 = vmatpush1.msra.mxu0 0.0
        %765 = vmatprep.mubr.f32.mxu0 0.0
        %766 = vmatmul.mubr.f32.gmra.mrb[0].mxu0 %v695
        %v767 = vpop.f32.mrb[0].mxu0
        %v768 = vadd.f32 0.0, %v767
        %v769 = vpop.f32.mrb[0].mxu0
        %v770 = vadd.f32 0.0, %v769
        %771 = vdwg.mxu0
        %v773 = vsel %vm235, %v684, 0
        %v775 = vsel %vm239, %v683, 0
        %v777 = vsel %vm239, %v688, 0
        %779 = vmatprep.subr.mxu0 %v777
        %780 = vmatpush1.msra.mxu0 %v775
        %781 = vmatprep.subr.mxu0 0.0
        %782 = vmatpush1.msra.mxu0 0.0
        %783 = vmatprep.subr.mxu0 0.0
        %784 = vmatpush1.msra.mxu0 0.0
        %785 = vmatprep.subr.mxu0 0.0
        %786 = vmatpush1.msra.mxu0 0.0
        %787 = vmatprep.subr.mxu0 0.0
        %788 = vmatpush1.msra.mxu0 0.0
        %789 = vmatprep.subr.mxu0 0.0
        %790 = vmatpush1.msra.mxu0 0.0
        %791 = vmatprep.subr.mxu0 0.0
        %792 = vmatpush1.msra.mxu0 0.0
        %793 = vmatprep.subr.mxu0 0.0
        %794 = vmatpush1.msra.mxu0 0.0
        %795 = vmatprep.subr.mxu0 0.0
        %796 = vmatpush1.msra.mxu0 0.0
        %797 = vmatprep.subr.mxu0 0.0
        %798 = vmatpush1.msra.mxu0 0.0
        %799 = vmatprep.subr.mxu0 0.0
        %800 = vmatpush1.msra.mxu0 0.0
        %801 = vmatprep.subr.mxu0 0.0
        %802 = vmatpush1.msra.mxu0 0.0
        %803 = vmatprep.subr.mxu0 0.0
        %804 = vmatpush1.msra.mxu0 0.0
        %805 = vmatprep.subr.mxu0 0.0
        %806 = vmatpush1.msra.mxu0 0.0
        %807 = vmatprep.subr.mxu0 0.0
        %808 = vmatpush1.msra.mxu0 0.0
        %809 = vmatprep.subr.mxu0 0.0
        %810 = vmatpush1.msra.mxu0 0.0
        %811 = vmatprep.subr.mxu0 0.0
        %812 = vmatpush1.msra.mxu0 0.0
        %813 = vmatprep.subr.mxu0 0.0
        %814 = vmatpush1.msra.mxu0 0.0
        %815 = vmatprep.subr.mxu0 0.0
        %816 = vmatpush1.msra.mxu0 0.0
        %817 = vmatprep.subr.mxu0 0.0
        %818 = vmatpush1.msra.mxu0 0.0
        %819 = vmatprep.subr.mxu0 0.0
        %820 = vmatpush1.msra.mxu0 0.0
        %821 = vmatprep.subr.mxu0 0.0
        %822 = vmatpush1.msra.mxu0 0.0
        %823 = vmatprep.subr.mxu0 0.0
        %824 = vmatpush1.msra.mxu0 0.0
        %825 = vmatprep.subr.mxu0 0.0
        %826 = vmatpush1.msra.mxu0 0.0
        %827 = vmatprep.subr.mxu0 0.0
        %828 = vmatpush1.msra.mxu0 0.0
        %829 = vmatprep.subr.mxu0 0.0
        %830 = vmatpush1.msra.mxu0 0.0
        %831 = vmatprep.subr.mxu0 0.0
        %832 = vmatpush1.msra.mxu0 0.0
        %833 = vmatprep.subr.mxu0 0.0
        %834 = vmatpush1.msra.mxu0 0.0
        %835 = vmatprep.subr.mxu0 0.0
        %836 = vmatpush1.msra.mxu0 0.0
        %837 = vmatprep.subr.mxu0 0.0
        %838 = vmatpush1.msra.mxu0 0.0
        %839 = vmatprep.subr.mxu0 0.0
        %840 = vmatpush1.msra.mxu0 0.0
        %841 = vmatprep.subr.mxu0 0.0
        %842 = vmatpush1.msra.mxu0 0.0
        %843 = vmatprep.mubr.f32.mxu0 0.0
        %844 = vmatmul.mubr.f32.gmra.mrb[0].mxu0 %v773
        %v845 = vpop.f32.mrb[0].mxu0
        %v846 = vadd.f32 %v768, %v845
        %v847 = vpop.f32.mrb[0].mxu0
        %v848 = vadd.f32 %v770, %v847
        %849 = vdwg.mxu0
        %v850 = vld [vmem:[#allocation2] sm:$0xff]
        %s851 = scalar_lea.vmem %s3, 8
        %v852 = vld [vmem:[%s851] sm:$0xf]
        %v854 = vcombine.high %v850, %v850
        %855 = vrot.lane.b32.xlu0 %v850, 126
        %v856 = vpop.permute.xlu0 %855
        %857 = vrot.lane.b32.xlu0 %v854, 126
        %v858 = vpop.permute.xlu0 %857
        %v859 = vsel %vm402, %v856, %v858
        %v861 = vsel %vm235, %v852, 0
        %v863 = vsel %vm239, %v859, 0
        %v865 = vsel %vm239, %v858, 0
        %867 = vmatprep.subr.mxu0 %v865
        %868 = vmatpush1.msra.mxu0 %v863
        %869 = vmatprep.subr.mxu0 0.0
        %870 = vmatpush1.msra.mxu0 0.0
        %871 = vmatprep.subr.mxu0 0.0
        %872 = vmatpush1.msra.mxu0 0.0
        %873 = vmatprep.subr.mxu0 0.0
        %874 = vmatpush1.msra.mxu0 0.0
        %875 = vmatprep.subr.mxu0 0.0
        %876 = vmatpush1.msra.mxu0 0.0
        %877 = vmatprep.subr.mxu0 0.0
        %878 = vmatpush1.msra.mxu0 0.0
        %879 = vmatprep.subr.mxu0 0.0
        %880 = vmatpush1.msra.mxu0 0.0
        %881 = vmatprep.subr.mxu0 0.0
        %882 = vmatpush1.msra.mxu0 0.0
        %883 = vmatprep.subr.mxu0 0.0
        %884 = vmatpush1.msra.mxu0 0.0
        %885 = vmatprep.subr.mxu0 0.0
        %886 = vmatpush1.msra.mxu0 0.0
        %887 = vmatprep.subr.mxu0 0.0
        %888 = vmatpush1.msra.mxu0 0.0
        %889 = vmatprep.subr.mxu0 0.0
        %890 = vmatpush1.msra.mxu0 0.0
        %891 = vmatprep.subr.mxu0 0.0
        %892 = vmatpush1.msra.mxu0 0.0
        %893 = vmatprep.subr.mxu0 0.0
        %894 = vmatpush1.msra.mxu0 0.0
        %895 = vmatprep.subr.mxu0 0.0
        %896 = vmatpush1.msra.mxu0 0.0
        %897 = vmatprep.subr.mxu0 0.0
        %898 = vmatpush1.msra.mxu0 0.0
        %899 = vmatprep.subr.mxu0 0.0
        %900 = vmatpush1.msra.mxu0 0.0
        %901 = vmatprep.subr.mxu0 0.0
        %902 = vmatpush1.msra.mxu0 0.0
        %903 = vmatprep.subr.mxu0 0.0
        %904 = vmatpush1.msra.mxu0 0.0
        %905 = vmatprep.subr.mxu0 0.0
        %906 = vmatpush1.msra.mxu0 0.0
        %907 = vmatprep.subr.mxu0 0.0
        %908 = vmatpush1.msra.mxu0 0.0
        %909 = vmatprep.subr.mxu0 0.0
        %910 = vmatpush1.msra.mxu0 0.0
        %911 = vmatprep.subr.mxu0 0.0
        %912 = vmatpush1.msra.mxu0 0.0
        %913 = vmatprep.subr.mxu0 0.0
        %914 = vmatpush1.msra.mxu0 0.0
        %915 = vmatprep.subr.mxu0 0.0
        %916 = vmatpush1.msra.mxu0 0.0
        %917 = vmatprep.subr.mxu0 0.0
        %918 = vmatpush1.msra.mxu0 0.0
        %919 = vmatprep.subr.mxu0 0.0
        %920 = vmatpush1.msra.mxu0 0.0
        %921 = vmatprep.subr.mxu0 0.0
        %922 = vmatpush1.msra.mxu0 0.0
        %923 = vmatprep.subr.mxu0 0.0
        %924 = vmatpush1.msra.mxu0 0.0
        %925 = vmatprep.subr.mxu0 0.0
        %926 = vmatpush1.msra.mxu0 0.0
        %927 = vmatprep.subr.mxu0 0.0
        %928 = vmatpush1.msra.mxu0 0.0
        %929 = vmatprep.subr.mxu0 0.0
        %930 = vmatpush1.msra.mxu0 0.0
        %931 = vmatprep.mubr.f32.mxu0 0.0
        %932 = vmatmul.mubr.f32.gmra.mrb[0].mxu0 %v861
        %v933 = vpop.f32.mrb[0].mxu0
        %v934 = vadd.f32 0.0, %v933
        %v935 = vpop.f32.mrb[0].mxu0
        %v936 = vadd.f32 0.0, %v935
        %937 = vdwg.mxu0
        %v938 = vadd.f32 %v846, %v934
        %v939 = vadd.f32 %v848, %v936
        %v940 = vld [vmem:[#allocation2] sm:$0xff]
        %s941 = scalar_lea.vmem %s3, 12
        %v942 = vld [vmem:[%s941] sm:$0xf]
        %v944 = vcombine.high %v940, %v940
        %945 = vrot.lane.b32.xlu0 %v940, 112
        %v946 = vpop.permute.xlu0 %945
        %947 = vrot.lane.b32.xlu0 %v944, 112
        %v948 = vpop.permute.xlu0 %947
        %v949 = vsel %vm493, %v946, %v948
        %v951 = vsel %vm235, %v942, 0
        %v953 = vsel %vm239, %v949, 0
        %v955 = vsel %vm239, %v948, 0
        %957 = vmatprep.subr.mxu0 %v955
        %958 = vmatpush1.msra.mxu0 %v953
        %959 = vmatprep.subr.mxu0 0.0
        %960 = vmatpush1.msra.mxu0 0.0
        %961 = vmatprep.subr.mxu0 0.0
        %962 = vmatpush1.msra.mxu0 0.0
        %963 = vmatprep.subr.mxu0 0.0
        %964 = vmatpush1.msra.mxu0 0.0
        %965 = vmatprep.subr.mxu0 0.0
        %966 = vmatpush1.msra.mxu0 0.0
        %967 = vmatprep.subr.mxu0 0.0
        %968 = vmatpush1.msra.mxu0 0.0
        %969 = vmatprep.subr.mxu0 0.0
        %970 = vmatpush1.msra.mxu0 0.0
        %971 = vmatprep.subr.mxu0 0.0
        %972 = vmatpush1.msra.mxu0 0.0
        %973 = vmatprep.subr.mxu0 0.0
        %974 = vmatpush1.msra.mxu0 0.0
        %975 = vmatprep.subr.mxu0 0.0
        %976 = vmatpush1.msra.mxu0 0.0
        %977 = vmatprep.subr.mxu0 0.0
        %978 = vmatpush1.msra.mxu0 0.0
        %979 = vmatprep.subr.mxu0 0.0
        %980 = vmatpush1.msra.mxu0 0.0
        %981 = vmatprep.subr.mxu0 0.0
        %982 = vmatpush1.msra.mxu0 0.0
        %983 = vmatprep.subr.mxu0 0.0
        %984 = vmatpush1.msra.mxu0 0.0
        %985 = vmatprep.subr.mxu0 0.0
        %986 = vmatpush1.msra.mxu0 0.0
        %987 = vmatprep.subr.mxu0 0.0
        %988 = vmatpush1.msra.mxu0 0.0
        %989 = vmatprep.subr.mxu0 0.0
        %990 = vmatpush1.msra.mxu0 0.0
        %991 = vmatprep.subr.mxu0 0.0
        %992 = vmatpush1.msra.mxu0 0.0
        %993 = vmatprep.subr.mxu0 0.0
        %994 = vmatpush1.msra.mxu0 0.0
        %995 = vmatprep.subr.mxu0 0.0
        %996 = vmatpush1.msra.mxu0 0.0
        %997 = vmatprep.subr.mxu0 0.0
        %998 = vmatpush1.msra.mxu0 0.0
        %999 = vmatprep.subr.mxu0 0.0
        %1000 = vmatpush1.msra.mxu0 0.0
        %1001 = vmatprep.subr.mxu0 0.0
        %1002 = vmatpush1.msra.mxu0 0.0
        %1003 = vmatprep.subr.mxu0 0.0
        %1004 = vmatpush1.msra.mxu0 0.0
        %1005 = vmatprep.subr.mxu0 0.0
        %1006 = vmatpush1.msra.mxu0 0.0
        %1007 = vmatprep.subr.mxu0 0.0
        %1008 = vmatpush1.msra.mxu0 0.0
        %1009 = vmatprep.subr.mxu0 0.0
        %1010 = vmatpush1.msra.mxu0 0.0
        %1011 = vmatprep.subr.mxu0 0.0
        %1012 = vmatpush1.msra.mxu0 0.0
        %1013 = vmatprep.subr.mxu0 0.0
        %1014 = vmatpush1.msra.mxu0 0.0
        %1015 = vmatprep.subr.mxu0 0.0
        %1016 = vmatpush1.msra.mxu0 0.0
        %1017 = vmatprep.subr.mxu0 0.0
        %1018 = vmatpush1.msra.mxu0 0.0
        %1019 = vmatprep.subr.mxu0 0.0
        %1020 = vmatpush1.msra.mxu0 0.0
        %1021 = vmatprep.mubr.f32.mxu0 0.0
        %1022 = vmatmul.mubr.f32.gmra.mrb[0].mxu0 %v951
        %v1023 = vpop.f32.mrb[0].mxu0
        %v1024 = vadd.f32 0.0, %v1023
        %v1025 = vpop.f32.mrb[0].mxu0
        %v1026 = vadd.f32 0.0, %v1025
        %1027 = vdwg.mxu0
        %v1028 = vadd.f32 %v938, %v1024
        %v1029 = vadd.f32 %v939, %v1026
        %v1030 = vld [vmem:[#allocation2] sm:$0xff]
        %s1031 = scalar_lea.vmem %s3, 16
        %v1032 = vld [vmem:[%s1031] sm:$0xf]
        %v1034 = vcombine.high %v1030, %v1030
        %1035 = vrot.lane.b32.xlu0 %v1030, 111
        %v1036 = vpop.permute.xlu0 %1035
        %1037 = vrot.lane.b32.xlu0 %v1034, 111
        %v1038 = vpop.permute.xlu0 %1037
        %v1039 = vsel %vm584, %v1036, %v1038
        %v1041 = vsel %vm235, %v1032, 0
        %v1043 = vsel %vm239, %v1039, 0
        %v1045 = vsel %vm239, %v1038, 0
        %1047 = vmatprep.subr.mxu0 %v1045
        %1048 = vmatpush1.msra.mxu0 %v1043
        %1049 = vmatprep.subr.mxu0 0.0
        %1050 = vmatpush1.msra.mxu0 0.0
        %1051 = vmatprep.subr.mxu0 0.0
        %1052 = vmatpush1.msra.mxu0 0.0
        %1053 = vmatprep.subr.mxu0 0.0
        %1054 = vmatpush1.msra.mxu0 0.0
        %1055 = vmatprep.subr.mxu0 0.0
        %1056 = vmatpush1.msra.mxu0 0.0
        %1057 = vmatprep.subr.mxu0 0.0
        %1058 = vmatpush1.msra.mxu0 0.0
        %1059 = vmatprep.subr.mxu0 0.0
        %1060 = vmatpush1.msra.mxu0 0.0
        %1061 = vmatprep.subr.mxu0 0.0
        %1062 = vmatpush1.msra.mxu0 0.0
        %1063 = vmatprep.subr.mxu0 0.0
        %1064 = vmatpush1.msra.mxu0 0.0
        %1065 = vmatprep.subr.mxu0 0.0
        %1066 = vmatpush1.msra.mxu0 0.0
        %1067 = vmatprep.subr.mxu0 0.0
        %1068 = vmatpush1.msra.mxu0 0.0
        %1069 = vmatprep.subr.mxu0 0.0
        %1070 = vmatpush1.msra.mxu0 0.0
        %1071 = vmatprep.subr.mxu0 0.0
        %1072 = vmatpush1.msra.mxu0 0.0
        %1073 = vmatprep.subr.mxu0 0.0
        %1074 = vmatpush1.msra.mxu0 0.0
        %1075 = vmatprep.subr.mxu0 0.0
        %1076 = vmatpush1.msra.mxu0 0.0
        %1077 = vmatprep.subr.mxu0 0.0
        %1078 = vmatpush1.msra.mxu0 0.0
        %1079 = vmatprep.subr.mxu0 0.0
        %1080 = vmatpush1.msra.mxu0 0.0
        %1081 = vmatprep.subr.mxu0 0.0
        %1082 = vmatpush1.msra.mxu0 0.0
        %1083 = vmatprep.subr.mxu0 0.0
        %1084 = vmatpush1.msra.mxu0 0.0
        %1085 = vmatprep.subr.mxu0 0.0
        %1086 = vmatpush1.msra.mxu0 0.0
        %1087 = vmatprep.subr.mxu0 0.0
        %1088 = vmatpush1.msra.mxu0 0.0
        %1089 = vmatprep.subr.mxu0 0.0
        %1090 = vmatpush1.msra.mxu0 0.0
        %1091 = vmatprep.subr.mxu0 0.0
        %1092 = vmatpush1.msra.mxu0 0.0
        %1093 = vmatprep.subr.mxu0 0.0
        %1094 = vmatpush1.msra.mxu0 0.0
        %1095 = vmatprep.subr.mxu0 0.0
        %1096 = vmatpush1.msra.mxu0 0.0
        %1097 = vmatprep.subr.mxu0 0.0
        %1098 = vmatpush1.msra.mxu0 0.0
        %1099 = vmatprep.subr.mxu0 0.0
        %1100 = vmatpush1.msra.mxu0 0.0
        %1101 = vmatprep.subr.mxu0 0.0
        %1102 = vmatpush1.msra.mxu0 0.0
        %1103 = vmatprep.subr.mxu0 0.0
        %1104 = vmatpush1.msra.mxu0 0.0
        %1105 = vmatprep.subr.mxu0 0.0
        %1106 = vmatpush1.msra.mxu0 0.0
        %1107 = vmatprep.subr.mxu0 0.0
        %1108 = vmatpush1.msra.mxu0 0.0
        %1109 = vmatprep.subr.mxu0 0.0
        %1110 = vmatpush1.msra.mxu0 0.0
        %1111 = vmatprep.mubr.f32.mxu0 0.0
        %1112 = vmatmul.mubr.f32.gmra.mrb[0].mxu0 %v1041
        %v1113 = vpop.f32.mrb[0].mxu0
        %v1114 = vadd.f32 0.0, %v1113
        %v1115 = vpop.f32.mrb[0].mxu0
        %v1116 = vadd.f32 0.0, %v1115
        %1117 = vdwg.mxu0
        %v1118 = vadd.f32 %v1028, %v1114
        %v1119 = vadd.f32 %v1029, %v1116
        %v1120 = vld [vmem:[%s222] sm:$0xff]
        %v1121 = vld [vmem:[%s4] sm:$0xf]
        %1123 = vset.pattern.permute.xlu0 0
        %1124 = vperm.xlu0 %1123, %v1121
        %v1125 = vpop.permute.xlu0 %1124
        %v1127 = vadd.f32 %v1118, %v1125
        %v1128 = vadd.f32 %v1119, %v1125
        %v1130 = vcombine.high %v1120, %v1120
        %1131 = vrot.lane.b32.xlu0 %v1120, 94
        %v1132 = vpop.permute.xlu0 %1131
        %1133 = vrot.lane.b32.xlu0 %v1130, 94
        %v1134 = vpop.permute.xlu0 %1133
        %vm1135 = vcmask 769024
        %v1136 = vsel %vm1135, %v1132, %v1134
        %v1139 = vadd.f32 %v1127, %v1136
        %v1140 = vadd.f32 %v1128, %v1134
        %v1143 = vcombine.low %v1139, %v1140
        %vm1145 = vcmask 523268
        %vm1146 = vmor %vm1145, %vm239
        %1147 = vst.msk [vmem:[%s217] sm:$0xff] %vm1146, %v1143
        %s1148 = sand.u32 %s137, 1
        %s1149 = scalar_lea.sflag [#allocation4], %s1148
        %s1150 = sand.u32 %s137, 1
        %s1151 = smul.addr %s1150, 8
        %s1152 = scalar_lea.vmem [#allocation3], %s1151
        // Predicated region
        $region41: #{tpu_custom_call.1} parent=39 // pred_check
          %p1153 = pneg %p147
        $region42: #{tpu_custom_call.1} parent=39 // pred_check_branch
          %1155 = sbr.rel (%p1153) target = $region44
        $region43: #{tpu_custom_call.1} parent=39 // pred_region
          %s1157 = ssub.s32 128, 128
          %1158 = vsyncadd %s1149, %s1157
          %s1159 = smul.addr %s19, 2
          %s1160 = smul.addr %s1159, 64
          %s1161 = scalar_lea.hbm %s5, %s1160
          %s1163 = sshll.u32 %s1152, 4
          %s1164 = int_to_ptr.vmem [resolvable:$true] %s1163
          %1166 = dma.vmem_to_hbm [thread:$0]  %s1164, 128, %s1161, %s1149
        $region44: #{tpu_custom_call.1} parent=39 // pred_fallthru
          _
      $region40: #{tpu_custom_call.1} parent=5 // pred_fallthru
        _
      %p1167 = scmp.le.s32.totalorder 2, %s14
      // Predicated region
      $region45: #{tpu_custom_call.1} parent=5 // pred_check
        %p1168 = pneg %p1167
      $region46: #{tpu_custom_call.1} parent=5 // pred_check_branch
        %1170 = sbr.rel (%p1168) target = $region48
      $region47: #{tpu_custom_call.1} parent=5 // pred_region
        %s1171 = ssub.s32 %s14, 2
        // Predicated region
        $region49: #{tpu_custom_call.1} parent=47 // pred_check
          %p1172 = pneg %p153
        $region50: #{tpu_custom_call.1} parent=47 // pred_check_branch
          %1174 = sbr.rel (%p1172) target = $region52
        $region51: #{tpu_custom_call.1} parent=47 // pred_region
          %s1175 = sand.u32 %s138, 1
          %s1176 = scalar_lea.sflag [#allocation4], %s1175
          %s1177 = sand.u32 %s138, 1
          %s1178 = smul.addr %s1177, 8
          %s1179 = scalar_lea.vmem [#allocation3], %s1178
          %1180 = dma.done %s1176, 128
        $region52: #{tpu_custom_call.1} parent=47 // pred_fallthru
          _
      $region48: #{tpu_custom_call.1} parent=5 // pred_fallthru
        _
    $region6: #{tpu_custom_call.1} parent=1 // loop_footer
      %s18 = sadd.s32 1, %s14
    $region7: #{tpu_custom_call.1} parent=1 // loop_footer_branch
      %13 = sbr.rel target = $region3
    $region8: #{tpu_custom_call.1} parent=1 // loop_exit
      _
    %1181 = vsyncpa [#allocation4], 1
    %s1182 = scalar_lea.sflag [#allocation4], 1
    %1183 = vsyncpa %s1182, 1

</llo_original>
